<compile_context>
chip_gen: v6e
topology: v6e:2x2x1
jax: 0.10.0
libtpu: 0.0.40
codegen_flags: <defaults>
</compile_context>

<pallas_src>
import jax
import jax.numpy as jnp
from jax.experimental import pallas as pl
from jax.experimental.pallas import tpu as pltpu


def mlp_kernel(x_ref, w1_ref, b1_ref, w2_ref, b2_ref, o_ref):
    # x_ref: (TB, 13), w1_ref: (13, H), b1_ref: (1, H), w2_ref: (H, 13), b2_ref: (1, 13)
    x = x_ref[...]
    # fc1 + ReLU (f32 accumulate on the MXU)
    h = jnp.dot(x, w1_ref[...], preferred_element_type=jnp.float32) + b1_ref[...]
    h = jnp.maximum(h, 0.0)
    # fc2 + ReLU
    y = jnp.dot(h, w2_ref[...], preferred_element_type=jnp.float32) + b2_ref[...]
    o_ref[...] = jnp.maximum(y, 0.0).astype(o_ref.dtype)


def _round_up(n, m):
    return ((n + m - 1) // m) * m


def optimal_net_forward(x, w1, b1, w2, b2, *, block_rows=8192):
    """y = relu(relu(x @ w1 + b1) @ w2 + b2), tiled over batch for large x."""
    B, Fin = x.shape
    H = w1.shape[1]
    Fout = w2.shape[1]

    if B <= block_rows:
        # ---- Small-batch path: single shot, no grid, everything VMEM-resident.
        Bp = _round_up(max(B, 1), 8)  # sublane-align the row count
        xp = x if Bp == B else jnp.pad(x, ((0, Bp - B), (0, 0)))
        out = pl.pallas_call(
            mlp_kernel,
            out_shape=jax.ShapeDtypeStruct((Bp, Fout), jnp.float32),
            in_specs=[pl.BlockSpec(memory_space=pltpu.MemorySpace.VMEM)] * 5,
            out_specs=pl.BlockSpec(memory_space=pltpu.MemorySpace.VMEM),
        )(xp, w1, b1, w2, b2)
        return out[:B]

    # ---- Large-batch path: stream x/y in big row tiles, keep weights resident.
    tb = _round_up(block_rows, 8)        # rows per tile (multiple of 8)
    Bp = _round_up(B, tb)
    xp = x if Bp == B else jnp.pad(x, ((0, Bp - B), (0, 0)))

    out = pl.pallas_call(
        mlp_kernel,
        out_shape=jax.ShapeDtypeStruct((Bp, Fout), jnp.float32),
        grid=(Bp // tb,),
        in_specs=[
            pl.BlockSpec((tb, Fin), lambda i: (i, 0)),   # x: streamed per tile
            pl.BlockSpec((Fin, H), lambda i: (0, 0)),    # W1: resident
            pl.BlockSpec((1, H), lambda i: (0, 0)),      # b1: resident
            pl.BlockSpec((H, Fout), lambda i: (0, 0)),   # W2: resident
            pl.BlockSpec((1, Fout), lambda i: (0, 0)),   # b2: resident
        ],
        out_specs=pl.BlockSpec((tb, Fout), lambda i: (i, 0)),
        compiler_params=pltpu.CompilerParams(
            dimension_semantics=("parallel",),           # v7x: shard across 2 TCs
            vmem_limit_bytes=32 * 1024 * 1024,
        ),
    )(xp, w1, b1, w2, b2)
    return out[:B]


def init_params(key, n_in, n_hid, n_out):
    # Deterministic init mimicking nn.Linear's U(-1/sqrt(fan_in), 1/sqrt(fan_in)).
    k1, k2, k3, k4 = jax.random.split(key, 4)
    lim1 = 1.0 / jnp.sqrt(jnp.float32(n_in))
    lim2 = 1.0 / jnp.sqrt(jnp.float32(n_hid))
    w1 = jax.random.uniform(k1, (n_in, n_hid), jnp.float32, -lim1, lim1)
    b1 = jax.random.uniform(k2, (1, n_hid), jnp.float32, -lim1, lim1)
    w2 = jax.random.uniform(k3, (n_hid, n_out), jnp.float32, -lim2, lim2)
    b2 = jax.random.uniform(k4, (1, n_out), jnp.float32, -lim2, lim2)
    return w1, b1, w2, b2


def _ref(x, w1, b1, w2, b2):
    return jnp.maximum(jnp.maximum(x @ w1 + b1, 0.0) @ w2 + b2, 0.0)


if __name__ == "__main__":
    key = jax.random.PRNGKey(0)
    kx, kx2, kp = jax.random.split(key, 3)

    n_in = 13        # fixed by the module (Linear(13, n_hid_n))
    n_hid = 32       # n_hid_n
    n_out = 13

    w1, b1, w2, b2 = init_params(kp, n_in, n_hid, n_out)

    # 1) Small batch: exercises the grid-less, VMEM-resident path.
    batch = 8
    x = jax.random.normal(kx, (batch, n_in), jnp.float32)
    out = jax.block_until_ready(optimal_net_forward(x, w1, b1, w2, b2))
    ref = _ref(x, w1, b1, w2, b2)
    assert out.shape == (batch, n_out)
    assert jnp.allclose(out, ref, atol=2e-5, rtol=2e-5)

    # 2) Larger, non-tile-aligned batch with a small tile override: exercises the
    #    batch-tiled (grid + padding) path without large test data.
    batch2 = 200
    x2 = jax.random.normal(kx2, (batch2, n_in), jnp.float32)
    out2 = jax.block_until_ready(
        optimal_net_forward(x2, w1, b1, w2, b2, block_rows=64)
    )
    ref2 = _ref(x2, w1, b1, w2, b2)
    assert out2.shape == (batch2, n_out)
    assert jnp.allclose(out2, ref2, atol=2e-5, rtol=2e-5)

    print("KERNEL_OK")
</pallas_src>

<mosaic_0001>
module attributes {stable_mosaic.version = 11 : i64} {
  func.func @mlp_kernel(%arg0: memref<8x13xf32, #tpu.memory_space<vmem>>, %arg1: memref<13x32xf32, #tpu.memory_space<vmem>>, %arg2: memref<1x32xf32, #tpu.memory_space<vmem>>, %arg3: memref<32x13xf32, #tpu.memory_space<vmem>>, %arg4: memref<1x13xf32, #tpu.memory_space<vmem>>, %arg5: memref<8x13xf32, #tpu.memory_space<vmem>>) attributes {dimension_semantics = [], scalar_prefetch = 0 : i64, scratch_operands = 0 : i64, tpu.core_type = #tpu.core_type<tc>} {
    %c0 = arith.constant 0 : index
    %c0_0 = arith.constant 0 : index
    %0 = vector.load %arg0[%c0, %c0_0] : memref<8x13xf32, #tpu.memory_space<vmem>>, vector<8x13xf32>
    %c0_1 = arith.constant 0 : index
    %c0_2 = arith.constant 0 : index
    %1 = vector.load %arg1[%c0_1, %c0_2] : memref<13x32xf32, #tpu.memory_space<vmem>>, vector<13x32xf32>
    %cst = arith.constant dense<0.000000e+00> : vector<8x32xf32>
    %2 = tpu.matmul %0, %1, %cst {dimension_numbers = #tpu.dot_dimension_numbers<[1], [0], [0], [1], [0, 0, 1, 1], [], []>} : vector<8x13xf32>, vector<13x32xf32>, vector<8x32xf32> -> vector<8x32xf32>
    %c0_3 = arith.constant 0 : index
    %c0_4 = arith.constant 0 : index
    %3 = vector.load %arg2[%c0_3, %c0_4] : memref<1x32xf32, #tpu.memory_space<vmem>>, vector<1x32xf32>
    %4 = vector.broadcast %3 : vector<1x32xf32> to vector<8x32xf32>
    %5 = arith.addf %2, %4 : vector<8x32xf32>
    %cst_5 = arith.constant 0.000000e+00 : f32
    %6 = vector.broadcast %cst_5 : f32 to vector<8x32xf32>
    %7 = arith.maximumf %5, %6 : vector<8x32xf32>
    %c0_6 = arith.constant 0 : index
    %c0_7 = arith.constant 0 : index
    %8 = vector.load %arg3[%c0_6, %c0_7] : memref<32x13xf32, #tpu.memory_space<vmem>>, vector<32x13xf32>
    %cst_8 = arith.constant dense<0.000000e+00> : vector<8x13xf32>
    %9 = tpu.matmul %7, %8, %cst_8 {dimension_numbers = #tpu.dot_dimension_numbers<[1], [0], [0], [1], [0, 0, 1, 1], [], []>} : vector<8x32xf32>, vector<32x13xf32>, vector<8x13xf32> -> vector<8x13xf32>
    %c0_9 = arith.constant 0 : index
    %c0_10 = arith.constant 0 : index
    %10 = vector.load %arg4[%c0_9, %c0_10] : memref<1x13xf32, #tpu.memory_space<vmem>>, vector<1x13xf32>
    %11 = vector.broadcast %10 : vector<1x13xf32> to vector<8x13xf32>
    %12 = arith.addf %9, %11 : vector<8x13xf32>
    %cst_11 = arith.constant 0.000000e+00 : f32
    %13 = vector.broadcast %cst_11 : f32 to vector<8x13xf32>
    %14 = arith.maximumf %12, %13 : vector<8x13xf32>
    %c0_12 = arith.constant 0 : index
    %c0_13 = arith.constant 0 : index
    %15 = vector.load %arg5[%c0_12, %c0_13] : memref<8x13xf32, #tpu.memory_space<vmem>>, vector<8x13xf32>
    tpu.vector_store %arg5[%c0_12, %c0_13], %14 {strides = array<i32>} : memref<8x13xf32, #tpu.memory_space<vmem>>, vector<8x13xf32>,
    return
  }
}

</mosaic_0001>

<llo_original>
// kernel: tpu_custom_call.1
$region0: #{tpu_custom_call.1}
  #allocation0 [shape = 'u32[]', space=smem, size = 0x4, offset = 0x4, fixed_abs, tag = 'smem constant byte address 0x4 - core index']
  #allocation1 [shape = 'u32[144,128]{1,0:T(1,128)}', space=vmem, size = 0x12000, scoped, tag = 'internal scratch']
  %s0 = inlined_call_operand.vmem [shape: f32[8,13], index: 0, kind: input, shape index: {}]
  %s1 = inlined_call_operand.vmem [shape: f32[13,32], index: 1, kind: input, shape index: {}]
  %s2 = inlined_call_operand.vmem [shape: f32[1,32], index: 2, kind: input, shape index: {}]
  %s3 = inlined_call_operand.vmem [shape: f32[32,13], index: 3, kind: input, shape index: {}]
  %s4 = inlined_call_operand.vmem [shape: f32[1,13], index: 4, kind: input, shape index: {}]
  %s5 = inlined_call_operand.hbm [shape: f32[8,13], index: 5, kind: output, shape index: {}]
  %s6 = sld [smem:[#allocation0]]
  $region30: #{tpu_custom_call.1} parent=0
    _
  %s8 = ssub.s32 1, %s6
  %s9 = scalar_select 0, %s8, %s6
  $region1: #{tpu_custom_call.1} parent=0
    #allocation2 [shape = 'u8[4096]{0}', space=vmem, size = 0x1000, scoped, tag = 'output window, operand 0, single buffered']
    #allocation3 [shape = 's32[1]{0}', space=sflag, size = 0x4, scoped, tag = 'scoped memory for tpu_custom_call.1']
    %10 = vsyncpa [#allocation3], 0
    // Predicated region
    $region2: #{tpu_custom_call.1} parent=1 // pred_check
      _
    $region3: #{tpu_custom_call.1} parent=1 // pred_check_branch
      %12 = sbr.rel (0) target = $region5
    $region4: #{tpu_custom_call.1} parent=1 // pred_region
      _
    $region5: #{tpu_custom_call.1} parent=1 // pred_fallthru
      _
    // Predicated region
    $region6: #{tpu_custom_call.1} parent=1 // pred_check
      _
    $region7: #{tpu_custom_call.1} parent=1 // pred_check_branch
      %14 = sbr.rel (0) target = $region9
    $region8: #{tpu_custom_call.1} parent=1 // pred_region
      _
    $region9: #{tpu_custom_call.1} parent=1 // pred_fallthru
      _
    // Predicated region
    $region10: #{tpu_custom_call.1} parent=1 // pred_check
      _
    $region11: #{tpu_custom_call.1} parent=1 // pred_check_branch
      %16 = sbr.rel (0) target = $region13
    $region12: #{tpu_custom_call.1} parent=1 // pred_region
      _
    $region13: #{tpu_custom_call.1} parent=1 // pred_fallthru
      _
    // Predicated region
    $region14: #{tpu_custom_call.1} parent=1 // pred_check
      _
    $region15: #{tpu_custom_call.1} parent=1 // pred_check_branch
      %18 = sbr.rel (0) target = $region17
    $region16: #{tpu_custom_call.1} parent=1 // pred_region
      _
    $region17: #{tpu_custom_call.1} parent=1 // pred_fallthru
      _
    // Predicated region
    $region18: #{tpu_custom_call.1} parent=1 // pred_check
      _
    $region19: #{tpu_custom_call.1} parent=1 // pred_check_branch
      %20 = sbr.rel (0) target = $region21
    $region20: #{tpu_custom_call.1} parent=1 // pred_region
      _
    $region21: #{tpu_custom_call.1} parent=1 // pred_fallthru
      _
    %v21 = vld [vmem:[%s0] sm:$0xff]
    %v22 = vld [vmem:[%s1] sm:$0xff]
    %v23 = vld [vmem:[%s1 + $0x8] sm:$0x1f]
    %v24 = vld [vmem:[%s2] sm:$0x1]
    %v26 = vlaneseq
    %v27 = vshrl.u32 %v26, 7
    %v28 = vsub.s32 0, %v27
    %v29 = vrot.slane %v24, %v28
    %vm31 = vcmask 105472
    %v33 = vsel %vm31, %v21, 0
    %vm35 = vcmask 1044480
    %v37 = vsel %vm35, %v23, 0
    %39 = vmatprep.subr.mxu0 0.0
    %40 = vmatpush1.msra.mxu0 0.0
    %41 = vmatprep.subr.mxu0 0.0
    %42 = vmatpush1.msra.mxu0 0.0
    %43 = vmatprep.subr.mxu0 0.0
    %44 = vmatpush1.msra.mxu0 0.0
    %45 = vmatprep.subr.mxu0 0.0
    %46 = vmatpush1.msra.mxu0 0.0
    %47 = vmatprep.subr.mxu0 0.0
    %48 = vmatpush1.msra.mxu0 0.0
    %49 = vmatprep.subr.mxu0 0.0
    %50 = vmatpush1.msra.mxu0 0.0
    %51 = vmatprep.subr.mxu0 0.0
    %52 = vmatpush1.msra.mxu0 0.0
    %53 = vmatprep.subr.mxu0 0.0
    %54 = vmatpush1.msra.mxu0 0.0
    %55 = vmatprep.subr.mxu0 0.0
    %56 = vmatpush1.msra.mxu0 0.0
    %57 = vmatprep.subr.mxu0 0.0
    %58 = vmatpush1.msra.mxu0 0.0
    %59 = vmatprep.subr.mxu0 0.0
    %60 = vmatpush1.msra.mxu0 0.0
    %61 = vmatprep.subr.mxu0 0.0
    %62 = vmatpush1.msra.mxu0 0.0
    %63 = vmatprep.subr.mxu0 0.0
    %64 = vmatpush1.msra.mxu0 0.0
    %65 = vmatprep.subr.mxu0 0.0
    %66 = vmatpush1.msra.mxu0 0.0
    %67 = vmatprep.subr.mxu0 0.0
    %68 = vmatpush1.msra.mxu0 %v37
    %69 = vmatprep.subr.mxu0 0.0
    %70 = vmatpush1.msra.mxu0 %v22
    %71 = vmatprep.subr.mxu0 0.0
    %72 = vmatpush2.msra.mxu0 0.0
    %73 = vmatprep.subr.mxu0 0.0
    %74 = vmatpush2.msra.mxu0 0.0
    %75 = vmatprep.subr.mxu0 0.0
    %76 = vmatpush2.msra.mxu0 0.0
    %77 = vmatprep.subr.mxu0 0.0
    %78 = vmatpush2.msra.mxu0 0.0
    %79 = vmatprep.subr.mxu0 0.0
    %80 = vmatpush2.msra.mxu0 0.0
    %81 = vmatprep.subr.mxu0 0.0
    %82 = vmatpush2.msra.mxu0 0.0
    %83 = vmatprep.subr.mxu0 0.0
    %84 = vmatpush2.msra.mxu0 0.0
    %85 = vmatprep.subr.mxu0 0.0
    %86 = vmatpush2.msra.mxu0 0.0
    %87 = vmatprep.subr.mxu0 0.0
    %88 = vmatpush2.msra.mxu0 0.0
    %89 = vmatprep.subr.mxu0 0.0
    %90 = vmatpush2.msra.mxu0 0.0
    %91 = vmatprep.subr.mxu0 0.0
    %92 = vmatpush2.msra.mxu0 0.0
    %93 = vmatprep.subr.mxu0 0.0
    %94 = vmatpush2.msra.mxu0 0.0
    %95 = vmatprep.subr.mxu0 0.0
    %96 = vmatpush2.msra.mxu0 0.0
    %97 = vmatprep.subr.mxu0 0.0
    %98 = vmatpush2.msra.mxu0 0.0
    %99 = vmatprep.subr.mxu0 0.0
    %100 = vmatpush2.msra.mxu0 0.0
    %101 = vmatprep.subr.mxu0 0.0
    %102 = vmatpush2.msra.mxu0 0.0
    %103 = vmatprep.mubr.f32.mxu0 0.0
    %104 = vmatmul.mubr.f32.gmra.mxu0 %v33
    %v105 = vpop.f32.mrf.mxu0
    %v106 = vadd.f32 %v29, %v105
    %v107 = vpop.f32.mrf.mxu0
    %108 = vdwg.mxu0
    %v109 = vmax.f32 %v106, 0.0
    %v110 = vld [vmem:[%s3] sm:$0xff]
    %v111 = vld [vmem:[%s3 + $0x8] sm:$0xff]
    %v112 = vld [vmem:[%s3 + $0x10] sm:$0xff]
    %v113 = vld [vmem:[%s3 + $0x18] sm:$0xff]
    %v114 = vld [vmem:[%s4] sm:$0x1]
    %v116 = vlaneseq
    %v117 = vshrl.u32 %v116, 7
    %v118 = vsub.s32 0, %v117
    %v119 = vrot.slane %v114, %v118
    %vm121 = vcmask 261120
    %v123 = vsel %vm121, %v109, 0
    %125 = vmatprep.subr.mxu0 0.0
    %126 = vmatpush1.msra.mxu0 0.0
    %127 = vmatprep.subr.mxu0 0.0
    %128 = vmatpush1.msra.mxu0 0.0
    %129 = vmatprep.subr.mxu0 0.0
    %130 = vmatpush1.msra.mxu0 0.0
    %131 = vmatprep.subr.mxu0 0.0
    %132 = vmatpush1.msra.mxu0 0.0
    %133 = vmatprep.subr.mxu0 0.0
    %134 = vmatpush1.msra.mxu0 0.0
    %135 = vmatprep.subr.mxu0 0.0
    %136 = vmatpush1.msra.mxu0 0.0
    %137 = vmatprep.subr.mxu0 0.0
    %138 = vmatpush1.msra.mxu0 0.0
    %139 = vmatprep.subr.mxu0 0.0
    %140 = vmatpush1.msra.mxu0 0.0
    %141 = vmatprep.subr.mxu0 0.0
    %142 = vmatpush1.msra.mxu0 0.0
    %143 = vmatprep.subr.mxu0 0.0
    %144 = vmatpush1.msra.mxu0 0.0
    %145 = vmatprep.subr.mxu0 0.0
    %146 = vmatpush1.msra.mxu0 0.0
    %147 = vmatprep.subr.mxu0 0.0
    %148 = vmatpush1.msra.mxu0 0.0
    %149 = vmatprep.subr.mxu0 0.0
    %150 = vmatpush1.msra.mxu0 %v113
    %151 = vmatprep.subr.mxu0 0.0
    %152 = vmatpush1.msra.mxu0 %v112
    %153 = vmatprep.subr.mxu0 0.0
    %154 = vmatpush1.msra.mxu0 %v111
    %155 = vmatprep.subr.mxu0 0.0
    %156 = vmatpush1.msra.mxu0 %v110
    %157 = vmatprep.subr.mxu0 0.0
    %158 = vmatpush2.msra.mxu0 0.0
    %159 = vmatprep.subr.mxu0 0.0
    %160 = vmatpush2.msra.mxu0 0.0
    %161 = vmatprep.subr.mxu0 0.0
    %162 = vmatpush2.msra.mxu0 0.0
    %163 = vmatprep.subr.mxu0 0.0
    %164 = vmatpush2.msra.mxu0 0.0
    %165 = vmatprep.subr.mxu0 0.0
    %166 = vmatpush2.msra.mxu0 0.0
    %167 = vmatprep.subr.mxu0 0.0
    %168 = vmatpush2.msra.mxu0 0.0
    %169 = vmatprep.subr.mxu0 0.0
    %170 = vmatpush2.msra.mxu0 0.0
    %171 = vmatprep.subr.mxu0 0.0
    %172 = vmatpush2.msra.mxu0 0.0
    %173 = vmatprep.subr.mxu0 0.0
    %174 = vmatpush2.msra.mxu0 0.0
    %175 = vmatprep.subr.mxu0 0.0
    %176 = vmatpush2.msra.mxu0 0.0
    %177 = vmatprep.subr.mxu0 0.0
    %178 = vmatpush2.msra.mxu0 0.0
    %179 = vmatprep.subr.mxu0 0.0
    %180 = vmatpush2.msra.mxu0 0.0
    %181 = vmatprep.subr.mxu0 0.0
    %182 = vmatpush2.msra.mxu0 0.0
    %183 = vmatprep.subr.mxu0 0.0
    %184 = vmatpush2.msra.mxu0 0.0
    %185 = vmatprep.subr.mxu0 0.0
    %186 = vmatpush2.msra.mxu0 0.0
    %187 = vmatprep.subr.mxu0 0.0
    %188 = vmatpush2.msra.mxu0 0.0
    %189 = vmatprep.mubr.f32.mxu0 0.0
    %190 = vmatmul.mubr.f32.gmra.mxu0 %v123
    %v191 = vpop.f32.mrf.mxu0
    %v192 = vadd.f32 %v119, %v191
    %v193 = vpop.f32.mrf.mxu0
    %194 = vdwg.mxu0
    %v195 = vmax.f32 %v192, 0.0
    %196 = vst.msk [vmem:[#allocation2] sm:$0xff] %vm31, %v195
    // Predicated region
    $region22: #{tpu_custom_call.1} parent=1 // pred_check
      _
    $region23: #{tpu_custom_call.1} parent=1 // pred_check_branch
      %198 = sbr.rel (0) target = $region25
    $region24: #{tpu_custom_call.1} parent=1 // pred_region
      %s200 = ssub.s32 128, 128
      %201 = vsyncadd [#allocation3], %s200
      %s203 = sshll.u32 [#allocation2], 4
      %s204 = int_to_ptr.vmem [resolvable:$true] %s203
      %206 = dma.vmem_to_hbm [thread:$0]  %s204, 128, %s5, [#allocation3]
    $region25: #{tpu_custom_call.1} parent=1 // pred_fallthru
      _
    // Predicated region
    $region26: #{tpu_custom_call.1} parent=1 // pred_check
      _
    $region27: #{tpu_custom_call.1} parent=1 // pred_check_branch
      %208 = sbr.rel (0) target = $region29
    $region28: #{tpu_custom_call.1} parent=1 // pred_region
      %209 = dma.done [#allocation3], 128
    $region29: #{tpu_custom_call.1} parent=1 // pred_fallthru
      _
    %210 = vsyncpa [#allocation3], 1

</llo_original>
